<compile_context>
chip_gen: v7x
topology: tpu7x:2x2x1
jax: 0.10.0
libtpu: 0.0.40
codegen_flags: <defaults>
</compile_context>

<pallas_src>
import jax
import jax.numpy as jnp
from jax.experimental import pallas as pl
from jax.experimental.pallas import tpu as pltpu


def _round_up(x, m):
    return (x + m - 1) // m * m


def _device_kind():
    try:
        return jax.devices()[0].device_kind.lower()
    except Exception:
        return ""


def _vmem_capacity_bytes():
    try:
        return int(pltpu.get_tpu_info().vmem_capacity_bytes)
    except Exception:
        pass
    # Fallback: v7x has 64 MiB / TensorCore, v5e/v6e have 128 MiB.
    return (64 << 20) if "v7" in _device_kind() else (128 << 20)


def _pad2d(a, rows, cols):
    r, c = a.shape
    if r == rows and c == cols:
        return a
    return jnp.pad(a, ((0, rows - r), (0, cols - c)))


def _weight_spec(shape, index_map):
    # Resident weights (constant index map): single-buffer to halve their VMEM
    # footprint (matters on v7x's 64 MiB). Fall back if pipeline_mode is absent.
    try:
        return pl.BlockSpec(shape, index_map, pipeline_mode=pl.Buffered(1))
    except Exception:
        return pl.BlockSpec(shape, index_map)


def _working_set_bytes(tm, tk, d_model_p, c_itemsize, out_itemsize, resident):
    w_buf = 1 if resident else 2                        # weight slab buffering
    acc = 0 if resident else tm * d_model_p * 4         # f32 accumulator scratch
    return (2 * tm * d_model_p * c_itemsize             # x tile (double-buffered)
            + 2 * tm * d_model_p * out_itemsize         # out tile (double-buffered)
            + w_buf * 2 * d_model_p * tk * c_itemsize   # W1 + W2 slabs
            + acc
            + tm * tk * (4 + c_itemsize))               # f32 h + bf16 cast temporaries


def _select_tiles(M, d_model_p, dff_p, c_itemsize, out_itemsize, budget, is_v5):
    # v5e (~240 FLOPs/byte crossover) is already compute-bound at tm=256;
    # v6e/v7x need bigger token tiles to amortize weight streaming.
    tm_max = 256 if is_v5 else 1024
    tm_max = max(16, min(tm_max, _round_up(M, 16)))
    tm_cands = [t for t in (1024, 512, 256, 128, 64, 32, 16) if t <= tm_max]

    # Preferred: weight-resident mode (k grid axis collapses to 1).
    for tm in tm_cands:
        if _working_set_bytes(tm, dff_p, d_model_p, c_itemsize, out_itemsize,
                              True) <= budget:
            return tm, dff_p, True

    # Fallback: K-tile the hidden dim with an f32 accumulator.
    tk_cands = [t for t in (512, 256, 128) if dff_p % t == 0]
    for tm in tm_cands:
        for tk in tk_cands:
            if _working_set_bytes(tm, tk, d_model_p, c_itemsize, out_itemsize,
                                  False) <= budget:
                return tm, tk, False
    return 16, 128, False  # last-resort minimal tiles


def _ff_kernel_resident(x_ref, w1_ref, w2_ref, o_ref):
    # Whole W1/W2 resident in VMEM; one fused pass per token tile, no scratch.
    h = jnp.dot(x_ref[...], w1_ref[...], preferred_element_type=jnp.float32)
    h = jax.nn.sigmoid(h)                       # f32 on the EUP (safe on v5e too)
    o_ref[...] = jnp.dot(h.astype(w2_ref.dtype), w2_ref[...],
                         preferred_element_type=jnp.float32).astype(o_ref.dtype)


def _ff_kernel_tiled(x_ref, w1_ref, w2_ref, o_ref, acc_ref):
    # K-tiled over the hidden (dff) axis; f32 accumulator carried across k.
    k = pl.program_id(1)

    @pl.when(k == 0)
    def _():
        acc_ref[...] = jnp.zeros_like(acc_ref)

    h = jax.nn.sigmoid(jnp.dot(x_ref[...], w1_ref[...],
                               preferred_element_type=jnp.float32))
    acc_ref[...] += jnp.dot(h.astype(w2_ref.dtype), w2_ref[...],
                            preferred_element_type=jnp.float32)

    @pl.when(k == pl.num_programs(1) - 1)
    def _():
        o_ref[...] = acc_ref[...].astype(o_ref.dtype)


def prepare_weights(w1, w2, compute_dtype=jnp.bfloat16):
    """Pad to 128-aligned lane-dense shapes and cast to the MXU compute dtype.

    Call once at init (hoisted out of the hot path). Weights are stored as
    (in_features, out_features), i.e. the transpose of torch nn.Linear.weight.
    """
    d_model, dff = w1.shape
    assert w2.shape == (dff, d_model)
    d_model_p = _round_up(d_model, 128)
    dff_p = _round_up(dff, 128)
    w1c = _pad2d(w1.astype(compute_dtype), d_model_p, dff_p)
    w2c = _pad2d(w2.astype(compute_dtype), dff_p, d_model_p)
    return w1c, w2c


def feedforward(x, w1c, w2c, d_model, *, compute_dtype=jnp.bfloat16):
    """x: (B, S, d_model); w1c/w2c: outputs of prepare_weights()."""
    B, S, d_in = x.shape
    assert d_in == d_model
    d_model_p, dff_p = w1c.shape
    assert w2c.shape == (dff_p, d_model_p)

    M = B * S
    c_itemsize = jnp.dtype(compute_dtype).itemsize
    out_itemsize = jnp.dtype(x.dtype).itemsize

    capacity = _vmem_capacity_bytes()
    budget = int(capacity * 0.70)        # tile-selection budget (headroom for compiler temps)
    vmem_limit = int(capacity * 0.90)    # per-generation limit, not a hard 64 MiB cap

    tm, tk, resident = _select_tiles(M, d_model_p, dff_p, c_itemsize,
                                     out_itemsize, budget,
                                     "v5" in _device_kind())

    M_p = _round_up(M, tm)
    n_m = M_p // tm
    x2d = _pad2d(x.reshape(M, d_in).astype(compute_dtype), M_p, d_model_p)

    w_streams = 1 if resident else n_m   # weight re-streaming when K-tiled
    cost = pl.CostEstimate(
        flops=4 * M_p * d_model_p * dff_p,            # two matmuls, 2*M*d*f each
        transcendentals=M_p * dff_p,                  # sigmoid
        bytes_accessed=int(x2d.size * c_itemsize
                           + (w1c.size + w2c.size) * c_itemsize * w_streams
                           + M_p * d_model_p * out_itemsize),
    )

    if resident:
        grid_spec = pltpu.PrefetchScalarGridSpec(
            num_scalar_prefetch=0,
            grid=(n_m,),
            in_specs=[
                pl.BlockSpec((tm, d_model_p), lambda i: (i, 0)),       # token tile
                _weight_spec((d_model_p, dff_p), lambda i: (0, 0)),    # full W1, resident
                _weight_spec((dff_p, d_model_p), lambda i: (0, 0)),    # full W2, resident
            ],
            out_specs=pl.BlockSpec((tm, d_model_p), lambda i: (i, 0)),
        )
        kernel = _ff_kernel_resident
        semantics = ("parallel",)
    else:
        grid_spec = pltpu.PrefetchScalarGridSpec(
            num_scalar_prefetch=0,
            grid=(n_m, dff_p // tk),
            in_specs=[
                pl.BlockSpec((tm, d_model_p), lambda i, k: (i, 0)),    # token tile
                pl.BlockSpec((d_model_p, tk), lambda i, k: (0, k)),    # W1 K-slice
                pl.BlockSpec((tk, d_model_p), lambda i, k: (k, 0)),    # W2 K-slice
            ],
            out_specs=pl.BlockSpec((tm, d_model_p), lambda i, k: (i, 0)),
            scratch_shapes=[pltpu.VMEM((tm, d_model_p), jnp.float32)],
        )
        kernel = _ff_kernel_tiled
        semantics = ("parallel", "arbitrary")

    out2d = pl.pallas_call(
        kernel,
        out_shape=jax.ShapeDtypeStruct((M_p, d_model_p), x.dtype),
        grid_spec=grid_spec,
        compiler_params=pltpu.CompilerParams(
            dimension_semantics=semantics,
            vmem_limit_bytes=vmem_limit),
        cost_estimate=cost,
    )(x2d, w1c, w2c)

    return out2d[:M, :d_model].reshape(B, S, d_model)


def _reference(x, w1, w2, compute_dtype=jnp.bfloat16):
    # Mirrors the kernel's precision path: bf16 operands, f32 accumulation,
    # f32 sigmoid, bf16 h for the second matmul.
    xb = x.astype(compute_dtype)
    h = jax.nn.sigmoid(
        jnp.einsum("bsd,df->bsf", xb, w1.astype(compute_dtype),
                   preferred_element_type=jnp.float32))
    y = jnp.einsum("bsf,fd->bsd", h.astype(compute_dtype),
                   w2.astype(compute_dtype),
                   preferred_element_type=jnp.float32)
    return y.astype(x.dtype)


if __name__ == "__main__":
    B, S = 2, 8
    d_model, dim_feedforward = 32, 64

    key = jax.random.PRNGKey(0)
    kx, k1, k2 = jax.random.split(key, 3)

    x = jax.random.normal(kx, (B, S, d_model), dtype=jnp.float32)
    # Deterministic "Linear" weights, stored as (in, out) == W^T of torch's (out, in).
    bound1 = 1.0 / jnp.sqrt(d_model)
    bound2 = 1.0 / jnp.sqrt(dim_feedforward)
    w1 = jax.random.uniform(k1, (d_model, dim_feedforward), jnp.float32,
                            -bound1, bound1)
    w2 = jax.random.uniform(k2, (dim_feedforward, d_model), jnp.float32,
                            -bound2, bound2)

    # Weight pad/cast done once, outside the hot path.
    w1c, w2c = prepare_weights(w1, w2)

    out = feedforward(x, w1c, w2c, d_model)
    out = jax.block_until_ready(out)

    ref = _reference(x, w1, w2)
    assert out.shape == (B, S, d_model)
    max_err = float(jnp.max(jnp.abs(out - ref)))
    assert jnp.allclose(out, ref, atol=2e-2, rtol=2e-2), max_err

    print("KERNEL_OK")
</pallas_src>

<mosaic_0001>
module attributes {stable_mosaic.version = 11 : i64} {
  func.func @_ff_kernel_resident(%arg0: i32, %arg1: memref<16x128xbf16, #tpu.memory_space<vmem>>, %arg2: memref<128x128xbf16, #tpu.memory_space<vmem>>, %arg3: memref<128x128xbf16, #tpu.memory_space<vmem>>, %arg4: memref<16x128xf32, #tpu.memory_space<vmem>>) attributes {dimension_semantics = [#tpu.dimension_semantics<parallel>], iteration_bounds = array<i64: 1>, scalar_prefetch = 0 : i64, scratch_operands = 0 : i64, tpu.core_type = #tpu.core_type<tc>, window_params = [{transform_indices = @transform_0, window_bounds = array<i64: 16, 128>}, {pipeline_mode = #tpu.pipeline_mode<synchronous>, transform_indices = @transform_1, window_bounds = array<i64: 128, 128>}, {pipeline_mode = #tpu.pipeline_mode<synchronous>, transform_indices = @transform_2, window_bounds = array<i64: 128, 128>}, {transform_indices = @transform_3, window_bounds = array<i64: 16, 128>}]} {
    %c0 = arith.constant 0 : index
    %c0_0 = arith.constant 0 : index
    %0 = vector.load %arg1[%c0, %c0_0] : memref<16x128xbf16, #tpu.memory_space<vmem>>, vector<16x128xbf16>
    %c0_1 = arith.constant 0 : index
    %c0_2 = arith.constant 0 : index
    %1 = vector.load %arg2[%c0_1, %c0_2] : memref<128x128xbf16, #tpu.memory_space<vmem>>, vector<128x128xbf16>
    %cst = arith.constant dense<0.000000e+00> : vector<16x128xf32>
    %2 = tpu.matmul %0, %1, %cst {dimension_numbers = #tpu.dot_dimension_numbers<[1], [0], [0], [1], [0, 0, 1, 1], [], []>} : vector<16x128xbf16>, vector<128x128xbf16>, vector<16x128xf32> -> vector<16x128xf32>
    %3 = arith.negf %2 : vector<16x128xf32>
    %4 = math.exp %3 : vector<16x128xf32>
    %cst_3 = arith.constant 1.000000e+00 : f32
    %5 = vector.broadcast %cst_3 : f32 to vector<16x128xf32>
    %6 = arith.addf %5, %4 : vector<16x128xf32>
    %7 = arith.divf %5, %6 : vector<16x128xf32>
    %8 = arith.truncf %7 : vector<16x128xf32> to vector<16x128xbf16>
    %c0_4 = arith.constant 0 : index
    %c0_5 = arith.constant 0 : index
    %9 = vector.load %arg3[%c0_4, %c0_5] : memref<128x128xbf16, #tpu.memory_space<vmem>>, vector<128x128xbf16>
    %cst_6 = arith.constant dense<0.000000e+00> : vector<16x128xf32>
    %10 = tpu.matmul %8, %9, %cst_6 {dimension_numbers = #tpu.dot_dimension_numbers<[1], [0], [0], [1], [0, 0, 1, 1], [], []>} : vector<16x128xbf16>, vector<128x128xbf16>, vector<16x128xf32> -> vector<16x128xf32>
    %c0_7 = arith.constant 0 : index
    %c0_8 = arith.constant 0 : index
    %11 = vector.load %arg4[%c0_7, %c0_8] : memref<16x128xf32, #tpu.memory_space<vmem>>, vector<16x128xf32>
    tpu.vector_store %arg4[%c0_7, %c0_8], %10 {strides = array<i32>} : memref<16x128xf32, #tpu.memory_space<vmem>>, vector<16x128xf32>,
    return
  }
  func.func @transform_0(%arg0: i32) -> (i32, i32) {
    %c0_i32 = arith.constant 0 : i32
    %c0_i32_0 = arith.constant 0 : i32
    return %arg0, %c0_i32 : i32, i32
  }
  func.func @transform_1(%arg0: i32) -> (i32, i32) {
    %c0_i32 = arith.constant 0 : i32
    %c0_i32_0 = arith.constant 0 : i32
    %c0_i32_1 = arith.constant 0 : i32
    return %c0_i32, %c0_i32_0 : i32, i32
  }
  func.func @transform_2(%arg0: i32) -> (i32, i32) {
    %c0_i32 = arith.constant 0 : i32
    %c0_i32_0 = arith.constant 0 : i32
    %c0_i32_1 = arith.constant 0 : i32
    return %c0_i32, %c0_i32_0 : i32, i32
  }
  func.func @transform_3(%arg0: i32) -> (i32, i32) {
    %c0_i32 = arith.constant 0 : i32
    %c0_i32_0 = arith.constant 0 : i32
    return %arg0, %c0_i32 : i32, i32
  }
}

</mosaic_0001>

<llo_original>
// kernel: tpu_custom_call.1
$region0: #{tpu_custom_call.1}
  #allocation0 [shape = 'u32[]', space=smem, size = 0x4, offset = 0x4, fixed_abs, tag = 'smem constant byte address 0x4 - core index']
  #allocation1 [shape = 'u32[144,128]{1,0:T(1,128)}', space=vmem, size = 0x12000, scoped, tag = 'internal scratch']
  %s0 = inlined_call_operand.hbm [shape: bf16[16,128], index: 0, kind: input, shape index: {}]
  %s1 = inlined_call_operand.hbm [shape: bf16[128,128], index: 1, kind: input, shape index: {}]
  %s2 = inlined_call_operand.hbm [shape: bf16[128,128], index: 2, kind: input, shape index: {}]
  %s3 = inlined_call_operand.hbm [shape: f32[16,128], index: 3, kind: output, shape index: {}]
  %s4 = sld [smem:[#allocation0]]
  $region34: #{tpu_custom_call.1} parent=0
    _
  %s6 = ssub.s32 1, %s4
  %s7 = scalar_select 0, %s6, %s4
  $region1: #{tpu_custom_call.1} parent=0
    #allocation2 [shape = 'u8[4096]{0}', space=vmem, size = 0x1000, scoped, tag = 'input window, operand 0, single buffered']
    #allocation3 [shape = 's32[1]{0}', space=sflag, size = 0x4, scoped, tag = 'scoped memory for tpu_custom_call.1']
    #allocation4 [shape = 's32[1]{0}', space=sflag, size = 0x4, scoped, tag = 'scoped memory for tpu_custom_call.1']
    #allocation5 [shape = 'u8[32768]{0}', space=vmem, size = 0x8000, scoped, tag = 'input window, operand 1, single buffered']
    #allocation6 [shape = 's32[1]{0}', space=sflag, size = 0x4, scoped, tag = 'scoped memory for tpu_custom_call.1']
    #allocation7 [shape = 'u8[32768]{0}', space=vmem, size = 0x8000, scoped, tag = 'input window, operand 2, single buffered']
    #allocation8 [shape = 'u8[8192]{0}', space=vmem, size = 0x2000, scoped, tag = 'output window, operand 0, single buffered']
    %8 = vsyncpa [#allocation3], 0
    %9 = vsyncpa [#allocation6], 0
    %10 = vsyncpa [#allocation4], 0
    // Predicated region
    $region2: #{tpu_custom_call.1} parent=1 // pred_check
      _
    $region3: #{tpu_custom_call.1} parent=1 // pred_check_branch
      %12 = sbr.rel (0) target = $region5
    $region4: #{tpu_custom_call.1} parent=1 // pred_region
      %s14 = ssub.s32 128, 128
      %15 = vsyncadd [#allocation3], %s14
      %s16 = sshll.u32 [#allocation2], 4
      %s17 = int_to_ptr.vmem [resolvable:$true] %s16
      %22 = dma.hbm_to_vmem [thread:$0]  %s0, 128, %s17, [#allocation3], 64, 64, 4
    $region5: #{tpu_custom_call.1} parent=1 // pred_fallthru
      _
    // Predicated region
    $region6: #{tpu_custom_call.1} parent=1 // pred_check
      _
    $region7: #{tpu_custom_call.1} parent=1 // pred_check_branch
      %24 = sbr.rel (0) target = $region9
    $region8: #{tpu_custom_call.1} parent=1 // pred_region
      %s26 = ssub.s32 1024, 1024
      %27 = vsyncadd [#allocation6], %s26
      %s28 = sshll.u32 [#allocation5], 4
      %s29 = int_to_ptr.vmem [resolvable:$true] %s28
      %34 = dma.hbm_to_vmem [thread:$0]  %s1, 1024, %s29, [#allocation6], 64, 64, 4
    $region9: #{tpu_custom_call.1} parent=1 // pred_fallthru
      _
    // Predicated region
    $region10: #{tpu_custom_call.1} parent=1 // pred_check
      _
    $region11: #{tpu_custom_call.1} parent=1 // pred_check_branch
      %36 = sbr.rel (0) target = $region13
    $region12: #{tpu_custom_call.1} parent=1 // pred_region
      %s38 = ssub.s32 1024, 1024
      %39 = vsyncadd [#allocation6], %s38
      %s40 = sshll.u32 [#allocation7], 4
      %s41 = int_to_ptr.vmem [resolvable:$true] %s40
      %46 = dma.hbm_to_vmem [thread:$0]  %s2, 1024, %s41, [#allocation6], 64, 64, 4
    $region13: #{tpu_custom_call.1} parent=1 // pred_fallthru
      _
    // Predicated region
    $region14: #{tpu_custom_call.1} parent=1 // pred_check
      _
    $region15: #{tpu_custom_call.1} parent=1 // pred_check_branch
      %48 = sbr.rel (0) target = $region17
    $region16: #{tpu_custom_call.1} parent=1 // pred_region
      %49 = dma.done [#allocation3], 128
    $region17: #{tpu_custom_call.1} parent=1 // pred_fallthru
      _
    // Predicated region
    $region18: #{tpu_custom_call.1} parent=1 // pred_check
      _
    $region19: #{tpu_custom_call.1} parent=1 // pred_check_branch
      %51 = sbr.rel (0) target = $region21
    $region20: #{tpu_custom_call.1} parent=1 // pred_region
      %52 = dma.done [#allocation6], 1024
    $region21: #{tpu_custom_call.1} parent=1 // pred_fallthru
      _
    // Predicated region
    $region22: #{tpu_custom_call.1} parent=1 // pred_check
      _
    $region23: #{tpu_custom_call.1} parent=1 // pred_check_branch
      %54 = sbr.rel (0) target = $region25
    $region24: #{tpu_custom_call.1} parent=1 // pred_region
      %55 = dma.done [#allocation6], 1024
    $region25: #{tpu_custom_call.1} parent=1 // pred_fallthru
      _
    %v57 = vld [vmem:[#allocation2] sm:$0xf]
    %v58 = vld [vmem:[#allocation2 + $0x4] sm:$0xf]
    %v59 = vld [vmem:[#allocation5] sm:$0xf]
    %v60 = vld [vmem:[#allocation5 + $0x4] sm:$0xf]
    %v61 = vld [vmem:[#allocation5 + $0x8] sm:$0xf]
    %v62 = vld [vmem:[#allocation5 + $0xc] sm:$0xf]
    %v63 = vld [vmem:[#allocation5 + $0x10] sm:$0xf]
    %v64 = vld [vmem:[#allocation5 + $0x14] sm:$0xf]
    %v65 = vld [vmem:[#allocation5 + $0x18] sm:$0xf]
    %v66 = vld [vmem:[#allocation5 + $0x1c] sm:$0xf]
    %v67 = vld [vmem:[#allocation5 + $0x20] sm:$0xf]
    %v68 = vld [vmem:[#allocation5 + $0x24] sm:$0xf]
    %v69 = vld [vmem:[#allocation5 + $0x28] sm:$0xf]
    %v70 = vld [vmem:[#allocation5 + $0x2c] sm:$0xf]
    %v71 = vld [vmem:[#allocation5 + $0x30] sm:$0xf]
    %v72 = vld [vmem:[#allocation5 + $0x34] sm:$0xf]
    %v73 = vld [vmem:[#allocation5 + $0x38] sm:$0xf]
    %v74 = vld [vmem:[#allocation5 + $0x3c] sm:$0xf]
    %v77 = vunpack.c.l.b16 %v57
    %v78 = vunpack.c.l.b16 %v58
    %v79 = vpack.c.b16 %v78, %v77
    %v97 = vunpack.c.l.b16 %v59
    %v98 = vunpack.c.l.b16 %v60
    %v99 = vunpack.c.l.b16 %v61
    %v100 = vunpack.c.l.b16 %v62
    %v101 = vunpack.c.l.b16 %v63
    %v102 = vunpack.c.l.b16 %v64
    %v103 = vunpack.c.l.b16 %v65
    %v104 = vunpack.c.l.b16 %v66
    %v105 = vunpack.c.l.b16 %v67
    %v106 = vunpack.c.l.b16 %v68
    %v107 = vunpack.c.l.b16 %v69
    %v108 = vunpack.c.l.b16 %v70
    %v109 = vunpack.c.l.b16 %v71
    %v110 = vunpack.c.l.b16 %v72
    %v111 = vunpack.c.l.b16 %v73
    %v112 = vunpack.c.l.b16 %v74
    %v113 = vpack.c.b16 %v98, %v97
    %v114 = vpack.c.b16 %v100, %v99
    %v115 = vpack.c.b16 %v102, %v101
    %v116 = vpack.c.b16 %v104, %v103
    %v117 = vpack.c.b16 %v106, %v105
    %v118 = vpack.c.b16 %v108, %v107
    %v119 = vpack.c.b16 %v110, %v109
    %v120 = vpack.c.b16 %v112, %v111
    %129 = vmatprep.subr.bf16.mxu0 0
    %130 = vmatpush1.bf16.msra.mxu0 %v113
    %131 = vmatprep.subr.bf16.mxu0 0
    %132 = vmatpush1.bf16.msra.mxu0 %v114
    %133 = vmatprep.subr.bf16.mxu0 0
    %134 = vmatpush1.bf16.msra.mxu0 %v115
    %135 = vmatprep.subr.bf16.mxu0 0
    %136 = vmatpush1.bf16.msra.mxu0 %v116
    %137 = vmatprep.subr.bf16.mxu0 0
    %138 = vmatpush1.bf16.msra.mxu0 %v117
    %139 = vmatprep.subr.bf16.mxu0 0
    %140 = vmatpush1.bf16.msra.mxu0 %v118
    %141 = vmatprep.subr.bf16.mxu0 0
    %142 = vmatpush1.bf16.msra.mxu0 %v119
    %143 = vmatprep.subr.bf16.mxu0 0
    %144 = vmatpush1.bf16.msra.mxu0 %v120
    %145 = vmatprep.subr.bf16.mxu0 0
    %146 = vmatpush1.bf16.msra.mxu0 0
    %147 = vmatprep.subr.bf16.mxu0 0
    %148 = vmatpush1.bf16.msra.mxu0 0
    %149 = vmatprep.subr.bf16.mxu0 0
    %150 = vmatpush1.bf16.msra.mxu0 0
    %151 = vmatprep.subr.bf16.mxu0 0
    %152 = vmatpush1.bf16.msra.mxu0 0
    %153 = vmatprep.subr.bf16.mxu0 0
    %154 = vmatpush1.bf16.msra.mxu0 0
    %155 = vmatprep.subr.bf16.mxu0 0
    %156 = vmatpush1.bf16.msra.mxu0 0
    %157 = vmatprep.subr.bf16.mxu0 0
    %158 = vmatpush1.bf16.msra.mxu0 0
    %159 = vmatprep.subr.bf16.mxu0 0
    %160 = vmatpush1.bf16.msra.mxu0 0
    %161 = vmatprep.mubr.bf16.mxu0 0
    %162 = vmatmul.mubr.bf16.gmra.mrb[0].mxu0 %v79
    %v163 = vpop.f32.mrb[0].mxu0
    %v164 = vadd.f32 0.0, %v163
    %v165 = vpop.f32.mrb[0].mxu0
    %v166 = vpop.f32.mrb[0].mxu0
    %v167 = vadd.f32 0.0, %v166
    %v168 = vpop.f32.mrb[0].mxu0
    %169 = vdwg.mxu0
    %v170 = vxor.u32 %v164, 2147483648
    %v171 = vxor.u32 %v167, 2147483648
    %v172 = vmul.f32 %v170, 1.442695
    %v173 = vpow.pop %v172
    %v174 = vmul.f32 %v171, 1.442695
    %v175 = vpow.pop %v174
    %v176 = vadd.f32 %v173, 1.0
    %v177 = vadd.f32 %v175, 1.0
    %v178 = vrcp.pop %v176
    %v179 = vmul.f32 1.0, %v178
    %v180 = vrcp.pop %v177
    %v181 = vmul.f32 1.0, %v180
    %v182 = vpack.c.bf16 %v181, %v179
    %v183 = vld [vmem:[#allocation7] sm:$0xf]
    %v184 = vld [vmem:[#allocation7 + $0x4] sm:$0xf]
    %v185 = vld [vmem:[#allocation7 + $0x8] sm:$0xf]
    %v186 = vld [vmem:[#allocation7 + $0xc] sm:$0xf]
    %v187 = vld [vmem:[#allocation7 + $0x10] sm:$0xf]
    %v188 = vld [vmem:[#allocation7 + $0x14] sm:$0xf]
    %v189 = vld [vmem:[#allocation7 + $0x18] sm:$0xf]
    %v190 = vld [vmem:[#allocation7 + $0x1c] sm:$0xf]
    %v191 = vld [vmem:[#allocation7 + $0x20] sm:$0xf]
    %v192 = vld [vmem:[#allocation7 + $0x24] sm:$0xf]
    %v193 = vld [vmem:[#allocation7 + $0x28] sm:$0xf]
    %v194 = vld [vmem:[#allocation7 + $0x2c] sm:$0xf]
    %v195 = vld [vmem:[#allocation7 + $0x30] sm:$0xf]
    %v196 = vld [vmem:[#allocation7 + $0x34] sm:$0xf]
    %v197 = vld [vmem:[#allocation7 + $0x38] sm:$0xf]
    %v198 = vld [vmem:[#allocation7 + $0x3c] sm:$0xf]
    %v215 = vunpack.c.l.b16 %v183
    %v216 = vunpack.c.l.b16 %v184
    %v217 = vunpack.c.l.b16 %v185
    %v218 = vunpack.c.l.b16 %v186
    %v219 = vunpack.c.l.b16 %v187
    %v220 = vunpack.c.l.b16 %v188
    %v221 = vunpack.c.l.b16 %v189
    %v222 = vunpack.c.l.b16 %v190
    %v223 = vunpack.c.l.b16 %v191
    %v224 = vunpack.c.l.b16 %v192
    %v225 = vunpack.c.l.b16 %v193
    %v226 = vunpack.c.l.b16 %v194
    %v227 = vunpack.c.l.b16 %v195
    %v228 = vunpack.c.l.b16 %v196
    %v229 = vunpack.c.l.b16 %v197
    %v230 = vunpack.c.l.b16 %v198
    %v231 = vpack.c.b16 %v216, %v215
    %v232 = vpack.c.b16 %v218, %v217
    %v233 = vpack.c.b16 %v220, %v219
    %v234 = vpack.c.b16 %v222, %v221
    %v235 = vpack.c.b16 %v224, %v223
    %v236 = vpack.c.b16 %v226, %v225
    %v237 = vpack.c.b16 %v228, %v227
    %v238 = vpack.c.b16 %v230, %v229
    %247 = vmatprep.subr.bf16.mxu0 0
    %248 = vmatpush1.bf16.msra.mxu0 %v231
    %249 = vmatprep.subr.bf16.mxu0 0
    %250 = vmatpush1.bf16.msra.mxu0 %v232
    %251 = vmatprep.subr.bf16.mxu0 0
    %252 = vmatpush1.bf16.msra.mxu0 %v233
    %253 = vmatprep.subr.bf16.mxu0 0
    %254 = vmatpush1.bf16.msra.mxu0 %v234
    %255 = vmatprep.subr.bf16.mxu0 0
    %256 = vmatpush1.bf16.msra.mxu0 %v235
    %257 = vmatprep.subr.bf16.mxu0 0
    %258 = vmatpush1.bf16.msra.mxu0 %v236
    %259 = vmatprep.subr.bf16.mxu0 0
    %260 = vmatpush1.bf16.msra.mxu0 %v237
    %261 = vmatprep.subr.bf16.mxu0 0
    %262 = vmatpush1.bf16.msra.mxu0 %v238
    %263 = vmatprep.subr.bf16.mxu0 0
    %264 = vmatpush1.bf16.msra.mxu0 0
    %265 = vmatprep.subr.bf16.mxu0 0
    %266 = vmatpush1.bf16.msra.mxu0 0
    %267 = vmatprep.subr.bf16.mxu0 0
    %268 = vmatpush1.bf16.msra.mxu0 0
    %269 = vmatprep.subr.bf16.mxu0 0
    %270 = vmatpush1.bf16.msra.mxu0 0
    %271 = vmatprep.subr.bf16.mxu0 0
    %272 = vmatpush1.bf16.msra.mxu0 0
    %273 = vmatprep.subr.bf16.mxu0 0
    %274 = vmatpush1.bf16.msra.mxu0 0
    %275 = vmatprep.subr.bf16.mxu0 0
    %276 = vmatpush1.bf16.msra.mxu0 0
    %277 = vmatprep.subr.bf16.mxu0 0
    %278 = vmatpush1.bf16.msra.mxu0 0
    %279 = vmatprep.mubr.bf16.mxu0 0
    %280 = vmatmul.mubr.bf16.gmra.mrb[0].mxu0 %v182
    %v281 = vpop.f32.mrb[0].mxu0
    %v282 = vadd.f32 0.0, %v281
    %v283 = vpop.f32.mrb[0].mxu0
    %v284 = vpop.f32.mrb[0].mxu0
    %v285 = vadd.f32 0.0, %v284
    %v286 = vpop.f32.mrb[0].mxu0
    %287 = vdwg.mxu0
    %288 = vst [vmem:[#allocation8] sm:$0xff] %v282
    %289 = vst [vmem:[#allocation8 + $0x8] sm:$0xff] %v285
    // Predicated region
    $region26: #{tpu_custom_call.1} parent=1 // pred_check
      _
    $region27: #{tpu_custom_call.1} parent=1 // pred_check_branch
      %291 = sbr.rel (0) target = $region29
    $region28: #{tpu_custom_call.1} parent=1 // pred_region
      %s293 = ssub.s32 256, 256
      %294 = vsyncadd [#allocation4], %s293
      %s295 = sshll.u32 [#allocation8], 4
      %s296 = int_to_ptr.vmem [resolvable:$true] %s295
      %301 = dma.vmem_to_hbm [thread:$0]  %s296, 256, %s3, [#allocation4], 128, 128, 8
    $region29: #{tpu_custom_call.1} parent=1 // pred_fallthru
      _
    // Predicated region
    $region30: #{tpu_custom_call.1} parent=1 // pred_check
      _
    $region31: #{tpu_custom_call.1} parent=1 // pred_check_branch
      %303 = sbr.rel (0) target = $region33
    $region32: #{tpu_custom_call.1} parent=1 // pred_region
      %304 = dma.done [#allocation4], 256
    $region33: #{tpu_custom_call.1} parent=1 // pred_fallthru
      _
    %305 = vsyncpa [#allocation3], 1
    %306 = vsyncpa [#allocation6], 1
    %307 = vsyncpa [#allocation4], 1

</llo_original>
